<compile_context>
chip_gen: v7x
topology: tpu7x:2x2x1
jax: 0.10.0
libtpu: 0.0.40
codegen_flags: <defaults>
</compile_context>

<pallas_src>
import functools

import jax
import jax.numpy as jnp
from jax.experimental import pallas as pl
from jax.experimental.pallas import tpu as pltpu


def _flatten_shape(shape, start_dim):
    """Output shape of torch.flatten(x, start_dim) for a static input shape."""
    ndim = len(shape)
    sd = start_dim % ndim if ndim > 0 else 0
    trail = 1
    for d in shape[sd:]:
        trail *= d
    return tuple(shape[:sd]) + (trail,)


def _dma_copy_kernel(src_ref, dst_ref, sem):
    # Whole-array HBM->HBM copy on the DMA engine: no VMEM staging, no vector
    # load/store slots, runs at HBM bandwidth on every TPU generation.
    cp = pltpu.make_async_copy(src_ref, dst_ref, sem)
    cp.start()
    cp.wait()


@functools.partial(jax.jit, static_argnames=("start_dim",))
def flatten_pallas_copy(x, start_dim):
    """torch.flatten(x, start_dim), materialized by a single Pallas HBM->HBM DMA."""
    out_shape = _flatten_shape(x.shape, start_dim)
    total = 1
    for d in out_shape:
        total *= d
    itemsize = jnp.dtype(x.dtype).itemsize

    # Metadata-only re-view so DMA src and dst have identical shapes.
    x_flat = jnp.reshape(x, out_shape)

    return pl.pallas_call(
        _dma_copy_kernel,
        out_shape=jax.ShapeDtypeStruct(out_shape, x.dtype),
        in_specs=[pl.BlockSpec(memory_space=pl.ANY)],
        out_specs=pl.BlockSpec(memory_space=pl.ANY),
        scratch_shapes=[pltpu.SemaphoreType.DMA],
        cost_estimate=pl.CostEstimate(
            flops=0,
            transcendentals=0,
            bytes_accessed=2 * total * itemsize,
        ),
    )(x_flat)


@functools.partial(jax.jit, static_argnames=("start_dim",))
def flatten_reshape(x, start_dim):
    """Zero-cost path (review item #1): flatten is metadata-only, just reshape."""
    return jnp.reshape(x, _flatten_shape(x.shape, start_dim))


class Flatten:
    """Pallas/JAX equivalent of the PyTorch Flatten(start_dim) module.

    use_pallas_copy=True runs the HBM->HBM DMA kernel (materializes a fresh
    buffer); use_pallas_copy=False returns the zero-traffic metadata reshape,
    which is the recommended production path.
    """

    def __init__(self, start_dim, use_pallas_copy=True):
        self.start_dim = start_dim
        self.use_pallas_copy = use_pallas_copy

    def __call__(self, x):
        if self.use_pallas_copy:
            return flatten_pallas_copy(x, self.start_dim)
        return flatten_reshape(x, self.start_dim)


if __name__ == "__main__":
    key = jax.random.PRNGKey(0)

    # NCHW conv-style input (the configuration used after conv trunks in
    # resnet.py): batch=2, channels=4, spatial=16x16, start_dim=1.
    x = jax.random.normal(key, (2, 4, 16, 16), dtype=jnp.float32)

    mod = Flatten(start_dim=1)           # Pallas DMA path
    y = mod(x)
    jax.block_until_ready(y)
    y_ref = jnp.reshape(x, (x.shape[0], -1))
    assert y.shape == (2, 4 * 16 * 16), y.shape
    assert y.dtype == x.dtype
    assert bool(jnp.all(y == y_ref))

    # Odd / non-128-aligned shapes need no fallback: the DMA path has no
    # (8,128) tiling constraints.
    x2 = jax.random.normal(jax.random.PRNGKey(1), (2, 3, 5, 7), dtype=jnp.float32)
    y2 = flatten_pallas_copy(x2, 2)
    jax.block_until_ready(y2)
    assert y2.shape == (2, 3, 35), y2.shape
    assert bool(jnp.all(y2 == jnp.reshape(x2, (2, 3, 35))))

    # Sub-32-bit dtype: pure DMA, so no sublane-packing / alignment concerns.
    x3 = jax.random.normal(jax.random.PRNGKey(2), (2, 4, 16, 16)).astype(jnp.bfloat16)
    y3 = flatten_pallas_copy(x3, 1)
    jax.block_until_ready(y3)
    assert y3.dtype == jnp.bfloat16
    assert bool(jnp.all(y3 == jnp.reshape(x3, (2, -1))))

    # Negative start_dim resolves like torch.flatten.
    y4 = flatten_pallas_copy(x, -2)
    jax.block_until_ready(y4)
    assert y4.shape == (2, 4, 16 * 16), y4.shape
    assert bool(jnp.all(y4 == jnp.reshape(x, (2, 4, 256))))

    # Zero-traffic metadata path (recommended default for callers that just
    # need torch.flatten semantics).
    y5 = Flatten(start_dim=1, use_pallas_copy=False)(x)
    jax.block_until_ready(y5)
    assert bool(jnp.all(y5 == y_ref))

    print("KERNEL_OK")
</pallas_src>

<mosaic_0001>
module attributes {stable_mosaic.version = 11 : i64} {
  func.func @_dma_copy_kernel(%arg0: memref<2x1024xf32, #tpu.memory_space<any>>, %arg1: memref<2x1024xf32, #tpu.memory_space<any>>, %arg2: memref<!tpu.dma_semaphore, #tpu.memory_space<semaphore_mem>>) attributes {dimension_semantics = [], scalar_prefetch = 0 : i64, scratch_operands = 1 : i64, tpu.core_type = #tpu.core_type<tc>} {
    tpu.enqueue_dma source(%arg0 : memref<2x1024xf32, #tpu.memory_space<any>>) target(%arg1 : memref<2x1024xf32, #tpu.memory_space<any>>) target_semaphore(%arg2 : memref<!tpu.dma_semaphore, #tpu.memory_space<semaphore_mem>>)
    tpu.wait_dma2 semaphore(%arg2 : memref<!tpu.dma_semaphore, #tpu.memory_space<semaphore_mem>>) src(%arg0 : memref<2x1024xf32, #tpu.memory_space<any>>) dst(%arg1 : memref<2x1024xf32, #tpu.memory_space<any>>)
    return
  }
}

</mosaic_0001>

<llo_original>
// kernel: flatten_pallas_copy.1
$region0: #{flatten_pallas_copy.1}
  #allocation0 [shape = 'u32[]', space=smem, size = 0x4, offset = 0x4, fixed_abs, tag = 'smem constant byte address 0x4 - core index']
  #allocation1 [shape = 'u32[144,128]{1,0:T(1,128)}', space=vmem, size = 0x12000, scoped, tag = 'internal scratch']
  #allocation2 [shape = 's32[1]{0}', space=sflag, size = 0x4, scoped, tag = 'scratch operand']
  #allocation3 [shape = 's32[]', space=sflag, size = 0x4, offset = 0, fixed_abs, tag = 'sflag constant byte address 0x0 - dummy sync flag']
  #allocation4 [shape = 's32[]', space=sflag, size = 0x4, offset = 0, fixed_abs, tag = 'sflag constant byte address 0x0 - dummy sync flag']
  #allocation5 [shape = 'u32[]', space=smem, size = 0x4, offset = 0x44, fixed_abs, tag = 'smem constant byte address 0x44 - assertion arg 0']
  #allocation6 [shape = 'u32[]', space=smem, size = 0x4, offset = 0x48, fixed_abs, tag = 'smem constant byte address 0x48 - assertion arg 1']
  %s0 = inlined_call_operand.vmem [shape: f32[2,1024], index: 0, kind: input, shape index: {}]
  %s1 = inlined_call_operand.hbm [shape: f32[2,1024], index: 1, kind: output, shape index: {}]
  %s2 = sld [smem:[#allocation0]]
  $region6: #{flatten_pallas_copy.1} parent=0
    _
  %s4 = ssub.s32 1, %s2
  %s5 = scalar_select 0, %s4, %s2
  // Predicated region
  $region2: #{flatten_pallas_copy.1} parent=0 // pred_check
    _
  $region3: #{flatten_pallas_copy.1} parent=0 // pred_check_branch
    %7 = sbr.rel target = $region5
  $region4: #{flatten_pallas_copy.1} parent=0 // pred_region
    %8 = sst [smem:[#allocation5]] [#allocation4]
    %9 = sst [smem:[#allocation6]] [#allocation3]
  $region5: #{flatten_pallas_copy.1} parent=0 // pred_fallthru
    _
  %11 = shalt.err (0)
  %s13 = sshll.u32 %s0, 4
  %s14 = int_to_ptr.vmem [resolvable:$true] %s13
  %16 = dma.vmem_to_hbm [thread:$0]  %s14, 256, %s1, [#allocation2]
  %s17 = smul.u32 2, 1
  %s18 = smul.u32 %s17, 8
  %s19 = sshll.u32 %s18, 4
  %20 = dma.done [#allocation2], %s19
  %21 = vsyncmov [#allocation2]
  %s22 = vpop.sfrf %21
  %p23 = scmp.eq.s32.totalorder %s22, 0
  %p24 = pneg %p23
  %26 = shalt.err (%p24)

</llo_original>
